<compile_context>
chip_gen: v5e
topology: v5e:2x2
jax: 0.10.0
libtpu: 0.0.40
codegen_flags: <defaults>
</compile_context>

<pallas_src>
import jax
import jax.numpy as jnp
from jax.experimental import pallas as pl
from jax.experimental.pallas import tpu as pltpu


def mlp_kernel(xT_ref,
               w1_ref, b1_ref, w2_ref, b2_ref, w3_ref, b3_ref,
               w4_ref, b4_ref, w5_ref, b5_ref,
               o_ref):
    f32 = jnp.float32
    bf16 = jnp.bfloat16

    xT = xT_ref[...].astype(bf16)                                # (8, TB)

    # fc1 / fc2 / fc3 on the MXU: bf16 inputs, f32 accumulation.
    h = jnp.dot(w1_ref[...], xT, preferred_element_type=f32)     # (128, TB)
    h = jnp.maximum(h + b1_ref[...], 0.0)

    h = jnp.dot(w2_ref[...], h.astype(bf16),
                preferred_element_type=f32)                      # (64, TB)
    h = jnp.maximum(h + b2_ref[...], 0.0)

    h = jnp.dot(w3_ref[...], h.astype(bf16),
                preferred_element_type=f32)                      # (32, TB)
    h = jnp.maximum(h + b3_ref[...], 0.0)

    # fc4 (32 -> 1): VPU broadcast-multiply + sublane reduction (XLU) instead
    # of an N=1 MXU pass.
    h4 = jnp.sum(h * w4_ref[...], axis=0, keepdims=True) + b4_ref[...]  # (1, TB)
    h4 = jnp.maximum(h4, 0.0)

    # fc5 (1 -> 1): scalar affine, then round(sigmoid(z)) == (z > 0).
    z = h4 * w5_ref[...] + b5_ref[...]                           # (1, TB)
    o_ref[...] = (z > 0.0).astype(o_ref.dtype)


def _resident(shape):
    # Same block every grid step -> fetched once, stays resident in VMEM.
    return pl.BlockSpec(shape, lambda i: (0, 0))


def salary_predictor_forward(x, params, *, tb=512):
    """x: (B, 8) float32. Returns (B, 1) float32 of {0., 1.}."""
    B = x.shape[0]
    n_tiles = pl.cdiv(B, tb)
    Bp = n_tiles * tb

    # Transposed (features, batch) layout -> lane-dense blocks everywhere.
    xT = x.T                                                     # (8, B)
    if Bp != B:
        xT = jnp.pad(xT, ((0, 0), (0, Bp - B)))

    # MXU layers get bf16 weights (cast once, outside the kernel); the tiny
    # N=1 layers stay f32 on the VPU.
    w1 = params["w1"].astype(jnp.bfloat16)                       # (128, 8)
    w2 = params["w2"].astype(jnp.bfloat16)                       # (64, 128)
    w3 = params["w3"].astype(jnp.bfloat16)                       # (32, 64)
    b1, b2, b3 = params["b1"], params["b2"], params["b3"]        # (out, 1)
    w4 = params["w4"].reshape(-1, 1)                             # (1,32)->(32,1)
    b4, w5, b5 = params["b4"], params["w5"], params["b5"]        # (1, 1) each

    out_row = pl.pallas_call(
        mlp_kernel,
        out_shape=jax.ShapeDtypeStruct((1, Bp), jnp.float32),
        grid=(n_tiles,),
        in_specs=[
            pl.BlockSpec((8, tb), lambda i: (0, i)),             # batch tile of x^T
            _resident(w1.shape), _resident(b1.shape),
            _resident(w2.shape), _resident(b2.shape),
            _resident(w3.shape), _resident(b3.shape),
            _resident(w4.shape), _resident(b4.shape),
            _resident(w5.shape), _resident(b5.shape),
        ],
        out_specs=pl.BlockSpec((1, tb), lambda i: (0, i)),
        compiler_params=pltpu.CompilerParams(
            dimension_semantics=("parallel",)),
    )(xT, w1, b1, w2, b2, w3, b3, w4, b4, w5, b5)

    return out_row[:, :B].T                                      # (B, 1)


def init_params(key):
    """nn.Linear-style init (uniform +/- 1/sqrt(fan_in)); weights stored in
    PyTorch (out, in) layout, biases as (out, 1) columns."""
    layer_dims = [(8, 128), (128, 64), (64, 32), (32, 1), (1, 1)]
    params = {}
    for i, (fan_in, fan_out) in enumerate(layer_dims, start=1):
        key, kw, kb = jax.random.split(key, 3)
        bound = 1.0 / float(fan_in) ** 0.5
        params[f"w{i}"] = jax.random.uniform(
            kw, (fan_out, fan_in), jnp.float32, minval=-bound, maxval=bound)
        params[f"b{i}"] = jax.random.uniform(
            kb, (fan_out, 1), jnp.float32, minval=-bound, maxval=bound)
    return params


def reference_forward(x, p):
    """Pure-JAX reference of the module's forward (same bf16 MXU inputs /
    f32 accumulation as the kernel; output is thresholded to {0,1})."""
    bf16, f32 = jnp.bfloat16, jnp.float32
    xT = x.T
    h = jnp.dot(p["w1"].astype(bf16), xT.astype(bf16),
                preferred_element_type=f32) + p["b1"]
    h = jax.nn.relu(h)
    h = jnp.dot(p["w2"].astype(bf16), h.astype(bf16),
                preferred_element_type=f32) + p["b2"]
    h = jax.nn.relu(h)
    h = jnp.dot(p["w3"].astype(bf16), h.astype(bf16),
                preferred_element_type=f32) + p["b3"]
    h = jax.nn.relu(h)
    h = jax.nn.relu(jnp.dot(p["w4"], h, preferred_element_type=f32) + p["b4"])
    z = p["w5"] * h + p["b5"]
    return jnp.round(jax.nn.sigmoid(z)).T                        # (B, 1)


if __name__ == "__main__":
    key = jax.random.PRNGKey(0)
    key, kx = jax.random.split(key)

    batch = 8
    x = jax.random.normal(kx, (batch, 8), jnp.float32)
    params = init_params(key)

    out = salary_predictor_forward(x, params)
    out = jax.block_until_ready(out)

    ref = reference_forward(x, params)
    assert out.shape == (batch, 1), out.shape
    assert jnp.allclose(out, ref, atol=1e-5), (out, ref)

    print("KERNEL_OK")
</pallas_src>

<mosaic_0001>
module attributes {stable_mosaic.version = 11 : i64} {
  func.func @mlp_kernel(%arg0: i32, %arg1: memref<8x512xf32, #tpu.memory_space<vmem>>, %arg2: memref<128x8xbf16, #tpu.memory_space<vmem>>, %arg3: memref<128x1xf32, #tpu.memory_space<vmem>>, %arg4: memref<64x128xbf16, #tpu.memory_space<vmem>>, %arg5: memref<64x1xf32, #tpu.memory_space<vmem>>, %arg6: memref<32x64xbf16, #tpu.memory_space<vmem>>, %arg7: memref<32x1xf32, #tpu.memory_space<vmem>>, %arg8: memref<32x1xf32, #tpu.memory_space<vmem>>, %arg9: memref<1x1xf32, #tpu.memory_space<vmem>>, %arg10: memref<1x1xf32, #tpu.memory_space<vmem>>, %arg11: memref<1x1xf32, #tpu.memory_space<vmem>>, %arg12: memref<1x512xf32, #tpu.memory_space<vmem>>) attributes {dimension_semantics = [#tpu.dimension_semantics<parallel>], iteration_bounds = array<i64: 1>, scalar_prefetch = 0 : i64, scratch_operands = 0 : i64, tpu.core_type = #tpu.core_type<tc>, window_params = [{transform_indices = @transform_0, window_bounds = array<i64: 8, 512>}, {pipeline_mode = #tpu.pipeline_mode<synchronous>, transform_indices = @transform_1, window_bounds = array<i64: 128, 8>}, {pipeline_mode = #tpu.pipeline_mode<synchronous>, transform_indices = @transform_2, window_bounds = array<i64: 128, 1>}, {pipeline_mode = #tpu.pipeline_mode<synchronous>, transform_indices = @transform_3, window_bounds = array<i64: 64, 128>}, {pipeline_mode = #tpu.pipeline_mode<synchronous>, transform_indices = @transform_4, window_bounds = array<i64: 64, 1>}, {pipeline_mode = #tpu.pipeline_mode<synchronous>, transform_indices = @transform_5, window_bounds = array<i64: 32, 64>}, {pipeline_mode = #tpu.pipeline_mode<synchronous>, transform_indices = @transform_6, window_bounds = array<i64: 32, 1>}, {pipeline_mode = #tpu.pipeline_mode<synchronous>, transform_indices = @transform_7, window_bounds = array<i64: 32, 1>}, {pipeline_mode = #tpu.pipeline_mode<synchronous>, transform_indices = @transform_8, window_bounds = array<i64: 1, 1>}, {pipeline_mode = #tpu.pipeline_mode<synchronous>, transform_indices = @transform_9, window_bounds = array<i64: 1, 1>}, {pipeline_mode = #tpu.pipeline_mode<synchronous>, transform_indices = @transform_10, window_bounds = array<i64: 1, 1>}, {transform_indices = @transform_11, window_bounds = array<i64: 1, 512>}]} {
    %c0 = arith.constant 0 : index
    %c0_0 = arith.constant 0 : index
    %0 = vector.load %arg1[%c0, %c0_0] : memref<8x512xf32, #tpu.memory_space<vmem>>, vector<8x512xf32>
    %1 = arith.truncf %0 : vector<8x512xf32> to vector<8x512xbf16>
    %c0_1 = arith.constant 0 : index
    %c0_2 = arith.constant 0 : index
    %2 = vector.load %arg2[%c0_1, %c0_2] : memref<128x8xbf16, #tpu.memory_space<vmem>>, vector<128x8xbf16>
    %cst = arith.constant dense<0.000000e+00> : vector<128x512xf32>
    %3 = tpu.matmul %2, %1, %cst {dimension_numbers = #tpu.dot_dimension_numbers<[1], [0], [0], [1], [0, 0, 1, 1], [], []>} : vector<128x8xbf16>, vector<8x512xbf16>, vector<128x512xf32> -> vector<128x512xf32>
    %c0_3 = arith.constant 0 : index
    %c0_4 = arith.constant 0 : index
    %4 = vector.load %arg3[%c0_3, %c0_4] : memref<128x1xf32, #tpu.memory_space<vmem>>, vector<128x1xf32>
    %5 = vector.broadcast %4 : vector<128x1xf32> to vector<128x512xf32>
    %6 = arith.addf %3, %5 : vector<128x512xf32>
    %cst_5 = arith.constant 0.000000e+00 : f32
    %7 = vector.broadcast %cst_5 : f32 to vector<128x512xf32>
    %8 = arith.maximumf %6, %7 : vector<128x512xf32>
    %c0_6 = arith.constant 0 : index
    %c0_7 = arith.constant 0 : index
    %9 = vector.load %arg4[%c0_6, %c0_7] : memref<64x128xbf16, #tpu.memory_space<vmem>>, vector<64x128xbf16>
    %10 = arith.truncf %8 : vector<128x512xf32> to vector<128x512xbf16>
    %cst_8 = arith.constant dense<0.000000e+00> : vector<64x512xf32>
    %11 = tpu.matmul %9, %10, %cst_8 {dimension_numbers = #tpu.dot_dimension_numbers<[1], [0], [0], [1], [0, 0, 1, 1], [], []>} : vector<64x128xbf16>, vector<128x512xbf16>, vector<64x512xf32> -> vector<64x512xf32>
    %c0_9 = arith.constant 0 : index
    %c0_10 = arith.constant 0 : index
    %12 = vector.load %arg5[%c0_9, %c0_10] : memref<64x1xf32, #tpu.memory_space<vmem>>, vector<64x1xf32>
    %13 = vector.broadcast %12 : vector<64x1xf32> to vector<64x512xf32>
    %14 = arith.addf %11, %13 : vector<64x512xf32>
    %cst_11 = arith.constant 0.000000e+00 : f32
    %15 = vector.broadcast %cst_11 : f32 to vector<64x512xf32>
    %16 = arith.maximumf %14, %15 : vector<64x512xf32>
    %c0_12 = arith.constant 0 : index
    %c0_13 = arith.constant 0 : index
    %17 = vector.load %arg6[%c0_12, %c0_13] : memref<32x64xbf16, #tpu.memory_space<vmem>>, vector<32x64xbf16>
    %18 = arith.truncf %16 : vector<64x512xf32> to vector<64x512xbf16>
    %cst_14 = arith.constant dense<0.000000e+00> : vector<32x512xf32>
    %19 = tpu.matmul %17, %18, %cst_14 {dimension_numbers = #tpu.dot_dimension_numbers<[1], [0], [0], [1], [0, 0, 1, 1], [], []>} : vector<32x64xbf16>, vector<64x512xbf16>, vector<32x512xf32> -> vector<32x512xf32>
    %c0_15 = arith.constant 0 : index
    %c0_16 = arith.constant 0 : index
    %20 = vector.load %arg7[%c0_15, %c0_16] : memref<32x1xf32, #tpu.memory_space<vmem>>, vector<32x1xf32>
    %21 = vector.broadcast %20 : vector<32x1xf32> to vector<32x512xf32>
    %22 = arith.addf %19, %21 : vector<32x512xf32>
    %cst_17 = arith.constant 0.000000e+00 : f32
    %23 = vector.broadcast %cst_17 : f32 to vector<32x512xf32>
    %24 = arith.maximumf %22, %23 : vector<32x512xf32>
    %c0_18 = arith.constant 0 : index
    %c0_19 = arith.constant 0 : index
    %25 = vector.load %arg8[%c0_18, %c0_19] : memref<32x1xf32, #tpu.memory_space<vmem>>, vector<32x1xf32>
    %26 = vector.broadcast %25 : vector<32x1xf32> to vector<32x512xf32>
    %27 = arith.mulf %24, %26 : vector<32x512xf32>
    %cst_20 = arith.constant dense<0.000000e+00> : vector<512xf32>
    %28 = vector.multi_reduction <add>, %27, %cst_20 [0] : vector<32x512xf32> to vector<512xf32>
    %29 = vector.shape_cast %28 : vector<512xf32> to vector<1x512xf32>
    %c0_21 = arith.constant 0 : index
    %c0_22 = arith.constant 0 : index
    %30 = vector.load %arg9[%c0_21, %c0_22] : memref<1x1xf32, #tpu.memory_space<vmem>>, vector<1x1xf32>
    %31 = vector.broadcast %30 : vector<1x1xf32> to vector<1x512xf32>
    %32 = arith.addf %29, %31 : vector<1x512xf32>
    %cst_23 = arith.constant 0.000000e+00 : f32
    %33 = vector.broadcast %cst_23 : f32 to vector<1x512xf32>
    %34 = arith.maximumf %32, %33 : vector<1x512xf32>
    %c0_24 = arith.constant 0 : index
    %c0_25 = arith.constant 0 : index
    %35 = vector.load %arg10[%c0_24, %c0_25] : memref<1x1xf32, #tpu.memory_space<vmem>>, vector<1x1xf32>
    %36 = vector.broadcast %35 : vector<1x1xf32> to vector<1x512xf32>
    %37 = arith.mulf %34, %36 : vector<1x512xf32>
    %c0_26 = arith.constant 0 : index
    %c0_27 = arith.constant 0 : index
    %38 = vector.load %arg11[%c0_26, %c0_27] : memref<1x1xf32, #tpu.memory_space<vmem>>, vector<1x1xf32>
    %39 = vector.broadcast %38 : vector<1x1xf32> to vector<1x512xf32>
    %40 = arith.addf %37, %39 : vector<1x512xf32>
    %cst_28 = arith.constant 0.000000e+00 : f32
    %41 = vector.broadcast %cst_28 : f32 to vector<1x512xf32>
    %42 = arith.cmpf ogt, %40, %41 : vector<1x512xf32>
    %43 = arith.extui %42 : vector<1x512xi1> to vector<1x512xi32>
    %44 = arith.sitofp %43 : vector<1x512xi32> to vector<1x512xf32>
    %c0_29 = arith.constant 0 : index
    %c0_30 = arith.constant 0 : index
    %45 = vector.load %arg12[%c0_29, %c0_30] : memref<1x512xf32, #tpu.memory_space<vmem>>, vector<1x512xf32>
    tpu.vector_store %arg12[%c0_29, %c0_30], %44 {strides = array<i32>} : memref<1x512xf32, #tpu.memory_space<vmem>>, vector<1x512xf32>,
    return
  }
  func.func @transform_0(%arg0: i32) -> (i32, i32) {
    %c0_i32 = arith.constant 0 : i32
    %c0_i32_0 = arith.constant 0 : i32
    return %c0_i32, %arg0 : i32, i32
  }
  func.func @transform_1(%arg0: i32) -> (i32, i32) {
    %c0_i32 = arith.constant 0 : i32
    %c0_i32_0 = arith.constant 0 : i32
    %c0_i32_1 = arith.constant 0 : i32
    return %c0_i32, %c0_i32_0 : i32, i32
  }
  func.func @transform_2(%arg0: i32) -> (i32, i32) {
    %c0_i32 = arith.constant 0 : i32
    %c0_i32_0 = arith.constant 0 : i32
    %c0_i32_1 = arith.constant 0 : i32
    return %c0_i32, %c0_i32_0 : i32, i32
  }
  func.func @transform_3(%arg0: i32) -> (i32, i32) {
    %c0_i32 = arith.constant 0 : i32
    %c0_i32_0 = arith.constant 0 : i32
    %c0_i32_1 = arith.constant 0 : i32
    return %c0_i32, %c0_i32_0 : i32, i32
  }
  func.func @transform_4(%arg0: i32) -> (i32, i32) {
    %c0_i32 = arith.constant 0 : i32
    %c0_i32_0 = arith.constant 0 : i32
    %c0_i32_1 = arith.constant 0 : i32
    return %c0_i32, %c0_i32_0 : i32, i32
  }
  func.func @transform_5(%arg0: i32) -> (i32, i32) {
    %c0_i32 = arith.constant 0 : i32
    %c0_i32_0 = arith.constant 0 : i32
    %c0_i32_1 = arith.constant 0 : i32
    return %c0_i32, %c0_i32_0 : i32, i32
  }
  func.func @transform_6(%arg0: i32) -> (i32, i32) {
    %c0_i32 = arith.constant 0 : i32
    %c0_i32_0 = arith.constant 0 : i32
    %c0_i32_1 = arith.constant 0 : i32
    return %c0_i32, %c0_i32_0 : i32, i32
  }
  func.func @transform_7(%arg0: i32) -> (i32, i32) {
    %c0_i32 = arith.constant 0 : i32
    %c0_i32_0 = arith.constant 0 : i32
    %c0_i32_1 = arith.constant 0 : i32
    return %c0_i32, %c0_i32_0 : i32, i32
  }
  func.func @transform_8(%arg0: i32) -> (i32, i32) {
    %c0_i32 = arith.constant 0 : i32
    %c0_i32_0 = arith.constant 0 : i32
    %c0_i32_1 = arith.constant 0 : i32
    return %c0_i32, %c0_i32_0 : i32, i32
  }
  func.func @transform_9(%arg0: i32) -> (i32, i32) {
    %c0_i32 = arith.constant 0 : i32
    %c0_i32_0 = arith.constant 0 : i32
    %c0_i32_1 = arith.constant 0 : i32
    return %c0_i32, %c0_i32_0 : i32, i32
  }
  func.func @transform_10(%arg0: i32) -> (i32, i32) {
    %c0_i32 = arith.constant 0 : i32
    %c0_i32_0 = arith.constant 0 : i32
    %c0_i32_1 = arith.constant 0 : i32
    return %c0_i32, %c0_i32_0 : i32, i32
  }
  func.func @transform_11(%arg0: i32) -> (i32, i32) {
    %c0_i32 = arith.constant 0 : i32
    %c0_i32_0 = arith.constant 0 : i32
    return %c0_i32, %arg0 : i32, i32
  }
}

</mosaic_0001>

<llo_original>
// kernel: tpu_custom_call.1
$region0: #{tpu_custom_call.1}
  #allocation0 [shape = 'u32[]', space=smem, size = 0x4, offset = 0x4, fixed_abs, tag = 'smem constant byte address 0x4 - core index']
  #allocation1 [shape = 'u32[72,128]{1,0:T(1,128)}', space=vmem, size = 0x9000, scoped, tag = 'internal scratch']
  #allocation2 [shape = 'f32[1,1]{1,0:T(1,128)S(1)}', space=vmem, size = 0x200, scoped, tag = 'scoped memory for tpu_custom_call.1']
  #allocation3 [shape = 'f32[1,1]{1,0:T(1,128)S(1)}', space=vmem, size = 0x200, scoped, tag = 'scoped memory for tpu_custom_call.1']
  #allocation4 [shape = 'f32[1,1]{1,0:T(1,128)S(1)}', space=vmem, size = 0x200, scoped, tag = 'scoped memory for tpu_custom_call.1']
  %s0 = inlined_call_operand.vmem [shape: f32[8,512], index: 0, kind: input, shape index: {}]
  %s1 = inlined_call_operand.vmem [shape: bf16[128,8], index: 1, kind: input, shape index: {}]
  %s2 = inlined_call_operand.vmem [shape: f32[128,1], index: 2, kind: input, shape index: {}]
  %s3 = inlined_call_operand.vmem [shape: bf16[64,128], index: 3, kind: input, shape index: {}]
  %s4 = inlined_call_operand.vmem [shape: f32[64,1], index: 4, kind: input, shape index: {}]
  %s5 = inlined_call_operand.vmem [shape: bf16[32,64], index: 5, kind: input, shape index: {}]
  %s6 = inlined_call_operand.vmem [shape: f32[32,1], index: 6, kind: input, shape index: {}]
  %s7 = inlined_call_operand.vmem [shape: f32[32,1], index: 7, kind: input, shape index: {}]
  %s8 = inlined_call_operand.<no memory space> [shape: f32[1,1], index: 8, kind: input, shape index: {}]
  %s9 = inlined_call_operand.<no memory space> [shape: f32[1,1], index: 9, kind: input, shape index: {}]
  %s10 = inlined_call_operand.<no memory space> [shape: f32[1,1], index: 10, kind: input, shape index: {}]
  %s11 = inlined_call_operand.hbm [shape: f32[1,512], index: 11, kind: output, shape index: {}]
  %s12 = sld [smem:[#allocation0]]
  $region54: #{tpu_custom_call.1} parent=0
    _
  %s14 = ssub.s32 1, %s12
  %s15 = scalar_select 0, %s14, %s12
  %v16 = vstv %s8
  %17 = vst [vmem:[#allocation2] sm:$0x1] %v16
  %v18 = vstv %s9
  %19 = vst [vmem:[#allocation3] sm:$0x1] %v18
  %v20 = vstv %s10
  %21 = vst [vmem:[#allocation4] sm:$0x1] %v20
  $region1: #{tpu_custom_call.1} parent=0
    #allocation5 [shape = 'u8[2048]{0}', space=vmem, size = 0x800, scoped, tag = 'output window, operand 0, single buffered']
    #allocation6 [shape = 's32[1]{0}', space=sflag, size = 0x4, scoped, tag = 'scoped memory for tpu_custom_call.1']
    %22 = vsyncpa [#allocation6], 0
    // Predicated region
    $region2: #{tpu_custom_call.1} parent=1 // pred_check
      _
    $region3: #{tpu_custom_call.1} parent=1 // pred_check_branch
      %24 = sbr.rel (0) target = $region5
    $region4: #{tpu_custom_call.1} parent=1 // pred_region
      _
    $region5: #{tpu_custom_call.1} parent=1 // pred_fallthru
      _
    // Predicated region
    $region6: #{tpu_custom_call.1} parent=1 // pred_check
      _
    $region7: #{tpu_custom_call.1} parent=1 // pred_check_branch
      %26 = sbr.rel (0) target = $region9
    $region8: #{tpu_custom_call.1} parent=1 // pred_region
      _
    $region9: #{tpu_custom_call.1} parent=1 // pred_fallthru
      _
    // Predicated region
    $region10: #{tpu_custom_call.1} parent=1 // pred_check
      _
    $region11: #{tpu_custom_call.1} parent=1 // pred_check_branch
      %28 = sbr.rel (0) target = $region13
    $region12: #{tpu_custom_call.1} parent=1 // pred_region
      _
    $region13: #{tpu_custom_call.1} parent=1 // pred_fallthru
      _
    // Predicated region
    $region14: #{tpu_custom_call.1} parent=1 // pred_check
      _
    $region15: #{tpu_custom_call.1} parent=1 // pred_check_branch
      %30 = sbr.rel (0) target = $region17
    $region16: #{tpu_custom_call.1} parent=1 // pred_region
      _
    $region17: #{tpu_custom_call.1} parent=1 // pred_fallthru
      _
    // Predicated region
    $region18: #{tpu_custom_call.1} parent=1 // pred_check
      _
    $region19: #{tpu_custom_call.1} parent=1 // pred_check_branch
      %32 = sbr.rel (0) target = $region21
    $region20: #{tpu_custom_call.1} parent=1 // pred_region
      _
    $region21: #{tpu_custom_call.1} parent=1 // pred_fallthru
      _
    // Predicated region
    $region22: #{tpu_custom_call.1} parent=1 // pred_check
      _
    $region23: #{tpu_custom_call.1} parent=1 // pred_check_branch
      %34 = sbr.rel (0) target = $region25
    $region24: #{tpu_custom_call.1} parent=1 // pred_region
      _
    $region25: #{tpu_custom_call.1} parent=1 // pred_fallthru
      _
    // Predicated region
    $region26: #{tpu_custom_call.1} parent=1 // pred_check
      _
    $region27: #{tpu_custom_call.1} parent=1 // pred_check_branch
      %36 = sbr.rel (0) target = $region29
    $region28: #{tpu_custom_call.1} parent=1 // pred_region
      _
    $region29: #{tpu_custom_call.1} parent=1 // pred_fallthru
      _
    // Predicated region
    $region30: #{tpu_custom_call.1} parent=1 // pred_check
      _
    $region31: #{tpu_custom_call.1} parent=1 // pred_check_branch
      %38 = sbr.rel (0) target = $region33
    $region32: #{tpu_custom_call.1} parent=1 // pred_region
      _
    $region33: #{tpu_custom_call.1} parent=1 // pred_fallthru
      _
    // Predicated region
    $region34: #{tpu_custom_call.1} parent=1 // pred_check
      _
    $region35: #{tpu_custom_call.1} parent=1 // pred_check_branch
      %40 = sbr.rel (0) target = $region37
    $region36: #{tpu_custom_call.1} parent=1 // pred_region
      _
    $region37: #{tpu_custom_call.1} parent=1 // pred_fallthru
      _
    // Predicated region
    $region38: #{tpu_custom_call.1} parent=1 // pred_check
      _
    $region39: #{tpu_custom_call.1} parent=1 // pred_check_branch
      %42 = sbr.rel (0) target = $region41
    $region40: #{tpu_custom_call.1} parent=1 // pred_region
      _
    $region41: #{tpu_custom_call.1} parent=1 // pred_fallthru
      _
    // Predicated region
    $region42: #{tpu_custom_call.1} parent=1 // pred_check
      _
    $region43: #{tpu_custom_call.1} parent=1 // pred_check_branch
      %44 = sbr.rel (0) target = $region45
    $region44: #{tpu_custom_call.1} parent=1 // pred_region
      _
    $region45: #{tpu_custom_call.1} parent=1 // pred_fallthru
      _
    %v46 = vld [vmem:[%s0] sm:$0xff]
    %v47 = vld [vmem:[%s0 + $0x8] sm:$0xff]
    %v48 = vld [vmem:[%s0 + $0x10] sm:$0xff]
    %v49 = vld [vmem:[%s0 + $0x18] sm:$0xff]
    %v50 = vpack.c.bf16 %v46, %v46
    %v51 = vpack.c.bf16 %v47, %v47
    %v52 = vpack.c.bf16 %v48, %v48
    %v53 = vpack.c.bf16 %v49, %v49
    %v54 = vld [vmem:[%s1] sm:$0xf]
    %v55 = vld [vmem:[%s1 + $0x4] sm:$0xf]
    %v56 = vld [vmem:[%s1 + $0x8] sm:$0xf]
    %v57 = vld [vmem:[%s1 + $0xc] sm:$0xf]
    %v58 = vld [vmem:[%s1 + $0x10] sm:$0xf]
    %v59 = vld [vmem:[%s1 + $0x14] sm:$0xf]
    %v60 = vld [vmem:[%s1 + $0x18] sm:$0xf]
    %v61 = vld [vmem:[%s1 + $0x1c] sm:$0xf]
    %v62 = vld [vmem:[%s1 + $0x20] sm:$0xf]
    %v63 = vld [vmem:[%s1 + $0x24] sm:$0xf]
    %v64 = vld [vmem:[%s1 + $0x28] sm:$0xf]
    %v65 = vld [vmem:[%s1 + $0x2c] sm:$0xf]
    %v66 = vld [vmem:[%s1 + $0x30] sm:$0xf]
    %v67 = vld [vmem:[%s1 + $0x34] sm:$0xf]
    %v68 = vld [vmem:[%s1 + $0x38] sm:$0xf]
    %v69 = vld [vmem:[%s1 + $0x3c] sm:$0xf]
    %v70 = vld [vmem:[%s2] sm:$0xff]
    %v71 = vld [vmem:[%s2 + $0x8] sm:$0xff]
    %v72 = vld [vmem:[%s2 + $0x10] sm:$0xff]
    %v73 = vld [vmem:[%s2 + $0x18] sm:$0xff]
    %v74 = vld [vmem:[%s2 + $0x20] sm:$0xff]
    %v75 = vld [vmem:[%s2 + $0x28] sm:$0xff]
    %v76 = vld [vmem:[%s2 + $0x30] sm:$0xff]
    %v77 = vld [vmem:[%s2 + $0x38] sm:$0xff]
    %v78 = vld [vmem:[%s2 + $0x40] sm:$0xff]
    %v79 = vld [vmem:[%s2 + $0x48] sm:$0xff]
    %v80 = vld [vmem:[%s2 + $0x50] sm:$0xff]
    %v81 = vld [vmem:[%s2 + $0x58] sm:$0xff]
    %v82 = vld [vmem:[%s2 + $0x60] sm:$0xff]
    %v83 = vld [vmem:[%s2 + $0x68] sm:$0xff]
    %v84 = vld [vmem:[%s2 + $0x70] sm:$0xff]
    %v85 = vld [vmem:[%s2 + $0x78] sm:$0xff]
    %87 = vset.pattern.permute.xlu0 0
    %88 = vperm.xlu0 %87, %v70
    %v89 = vpop.permute.xlu0 %88
    %92 = vset.pattern.permute.xlu0 0
    %93 = vperm.xlu0 %92, %v71
    %v94 = vpop.permute.xlu0 %93
    %97 = vset.pattern.permute.xlu0 0
    %98 = vperm.xlu0 %97, %v72
    %v99 = vpop.permute.xlu0 %98
    %102 = vset.pattern.permute.xlu0 0
    %103 = vperm.xlu0 %102, %v73
    %v104 = vpop.permute.xlu0 %103
    %107 = vset.pattern.permute.xlu0 0
    %108 = vperm.xlu0 %107, %v74
    %v109 = vpop.permute.xlu0 %108
    %112 = vset.pattern.permute.xlu0 0
    %113 = vperm.xlu0 %112, %v75
    %v114 = vpop.permute.xlu0 %113
    %117 = vset.pattern.permute.xlu0 0
    %118 = vperm.xlu0 %117, %v76
    %v119 = vpop.permute.xlu0 %118
    %122 = vset.pattern.permute.xlu0 0
    %123 = vperm.xlu0 %122, %v77
    %v124 = vpop.permute.xlu0 %123
    %127 = vset.pattern.permute.xlu0 0
    %128 = vperm.xlu0 %127, %v78
    %v129 = vpop.permute.xlu0 %128
    %132 = vset.pattern.permute.xlu0 0
    %133 = vperm.xlu0 %132, %v79
    %v134 = vpop.permute.xlu0 %133
    %137 = vset.pattern.permute.xlu0 0
    %138 = vperm.xlu0 %137, %v80
    %v139 = vpop.permute.xlu0 %138
    %142 = vset.pattern.permute.xlu0 0
    %143 = vperm.xlu0 %142, %v81
    %v144 = vpop.permute.xlu0 %143
    %147 = vset.pattern.permute.xlu0 0
    %148 = vperm.xlu0 %147, %v82
    %v149 = vpop.permute.xlu0 %148
    %152 = vset.pattern.permute.xlu0 0
    %153 = vperm.xlu0 %152, %v83
    %v154 = vpop.permute.xlu0 %153
    %157 = vset.pattern.permute.xlu0 0
    %158 = vperm.xlu0 %157, %v84
    %v159 = vpop.permute.xlu0 %158
    %162 = vset.pattern.permute.xlu0 0
    %163 = vperm.xlu0 %162, %v85
    %v164 = vpop.permute.xlu0 %163
    %v182 = vunpack.c.l.b16 %v54
    %v183 = vunpack.c.l.b16 %v55
    %v184 = vunpack.c.l.b16 %v56
    %v185 = vunpack.c.l.b16 %v57
    %v186 = vunpack.c.l.b16 %v58
    %v187 = vunpack.c.l.b16 %v59
    %v188 = vunpack.c.l.b16 %v60
    %v189 = vunpack.c.l.b16 %v61
    %v190 = vunpack.c.l.b16 %v62
    %v191 = vunpack.c.l.b16 %v63
    %v192 = vunpack.c.l.b16 %v64
    %v193 = vunpack.c.l.b16 %v65
    %v194 = vunpack.c.l.b16 %v66
    %v195 = vunpack.c.l.b16 %v67
    %v196 = vunpack.c.l.b16 %v68
    %v197 = vunpack.c.l.b16 %v69
    %v198 = vpack.c.b16 %v183, %v182
    %v199 = vpack.c.b16 %v185, %v184
    %v200 = vpack.c.b16 %v187, %v186
    %v201 = vpack.c.b16 %v189, %v188
    %v202 = vpack.c.b16 %v191, %v190
    %v203 = vpack.c.b16 %v193, %v192
    %v204 = vpack.c.b16 %v195, %v194
    %v205 = vpack.c.b16 %v197, %v196
    %vm206 = vcmask 64512
    %v208 = vsel %vm206, %v198, 0
    %v211 = vsel %vm206, %v199, 0
    %v214 = vsel %vm206, %v200, 0
    %v217 = vsel %vm206, %v201, 0
    %v220 = vsel %vm206, %v202, 0
    %v223 = vsel %vm206, %v203, 0
    %v226 = vsel %vm206, %v204, 0
    %v229 = vsel %vm206, %v205, 0
    %vm231 = vcmask 1043456
    %v233 = vsel %vm231, %v50, 0
    %v236 = vsel %vm231, %v51, 0
    %v239 = vsel %vm231, %v52, 0
    %v242 = vsel %vm231, %v53, 0
    %244 = vmatpush.bf16.msra.mxu0 0
    %245 = vmatpush.bf16.msra.mxu0 0
    %246 = vmatpush.bf16.msra.mxu0 0
    %247 = vmatpush.bf16.msra.mxu0 0
    %248 = vmatpush.bf16.msra.mxu0 0
    %249 = vmatpush.bf16.msra.mxu0 0
    %250 = vmatpush.bf16.msra.mxu0 0
    %251 = vmatpush.bf16.msra.mxu0 %v233
    %252 = vmatmul.bf16.gmra.mxu0 %v208
    %v253 = vpop.f32.mrf.mxu0
    %v254 = vadd.f32 %v89, %v253
    %v255 = vpop.f32.mrf.mxu0
    %v256 = vadd.f32 %v94, %v255
    %257 = vmatmul.bf16.gmra.mxu0 %v211
    %v258 = vpop.f32.mrf.mxu0
    %v259 = vadd.f32 %v99, %v258
    %v260 = vpop.f32.mrf.mxu0
    %v261 = vadd.f32 %v104, %v260
    %262 = vmatmul.bf16.gmra.mxu0 %v214
    %v263 = vpop.f32.mrf.mxu0
    %v264 = vadd.f32 %v109, %v263
    %v265 = vpop.f32.mrf.mxu0
    %v266 = vadd.f32 %v114, %v265
    %267 = vmatmul.bf16.gmra.mxu0 %v217
    %v268 = vpop.f32.mrf.mxu0
    %v269 = vadd.f32 %v119, %v268
    %v270 = vpop.f32.mrf.mxu0
    %v271 = vadd.f32 %v124, %v270
    %272 = vmatmul.bf16.gmra.mxu0 %v220
    %v273 = vpop.f32.mrf.mxu0
    %v274 = vadd.f32 %v129, %v273
    %v275 = vpop.f32.mrf.mxu0
    %v276 = vadd.f32 %v134, %v275
    %277 = vmatmul.bf16.gmra.mxu0 %v223
    %v278 = vpop.f32.mrf.mxu0
    %v279 = vadd.f32 %v139, %v278
    %v280 = vpop.f32.mrf.mxu0
    %v281 = vadd.f32 %v144, %v280
    %282 = vmatmul.bf16.gmra.mxu0 %v226
    %v283 = vpop.f32.mrf.mxu0
    %v284 = vadd.f32 %v149, %v283
    %v285 = vpop.f32.mrf.mxu0
    %v286 = vadd.f32 %v154, %v285
    %287 = vmatmul.bf16.gmra.mxu0 %v229
    %v288 = vpop.f32.mrf.mxu0
    %v289 = vadd.f32 %v159, %v288
    %v290 = vpop.f32.mrf.mxu0
    %v291 = vadd.f32 %v164, %v290
    %292 = vdwg.mxu0
    %293 = vmatpush.bf16.msra.mxu0 0
    %294 = vmatpush.bf16.msra.mxu0 0
    %295 = vmatpush.bf16.msra.mxu0 0
    %296 = vmatpush.bf16.msra.mxu0 0
    %297 = vmatpush.bf16.msra.mxu0 0
    %298 = vmatpush.bf16.msra.mxu0 0
    %299 = vmatpush.bf16.msra.mxu0 0
    %300 = vmatpush.bf16.msra.mxu0 %v236
    %301 = vmatmul.bf16.gmra.mxu0 %v208
    %v302 = vpop.f32.mrf.mxu0
    %v303 = vadd.f32 %v89, %v302
    %v304 = vpop.f32.mrf.mxu0
    %v305 = vadd.f32 %v94, %v304
    %306 = vmatmul.bf16.gmra.mxu0 %v211
    %v307 = vpop.f32.mrf.mxu0
    %v308 = vadd.f32 %v99, %v307
    %v309 = vpop.f32.mrf.mxu0
    %v310 = vadd.f32 %v104, %v309
    %311 = vmatmul.bf16.gmra.mxu0 %v214
    %v312 = vpop.f32.mrf.mxu0
    %v313 = vadd.f32 %v109, %v312
    %v314 = vpop.f32.mrf.mxu0
    %v315 = vadd.f32 %v114, %v314
    %316 = vmatmul.bf16.gmra.mxu0 %v217
    %v317 = vpop.f32.mrf.mxu0
    %v318 = vadd.f32 %v119, %v317
    %v319 = vpop.f32.mrf.mxu0
    %v320 = vadd.f32 %v124, %v319
    %321 = vmatmul.bf16.gmra.mxu0 %v220
    %v322 = vpop.f32.mrf.mxu0
    %v323 = vadd.f32 %v129, %v322
    %v324 = vpop.f32.mrf.mxu0
    %v325 = vadd.f32 %v134, %v324
    %326 = vmatmul.bf16.gmra.mxu0 %v223
    %v327 = vpop.f32.mrf.mxu0
    %v328 = vadd.f32 %v139, %v327
    %v329 = vpop.f32.mrf.mxu0
    %v330 = vadd.f32 %v144, %v329
    %331 = vmatmul.bf16.gmra.mxu0 %v226
    %v332 = vpop.f32.mrf.mxu0
    %v333 = vadd.f32 %v149, %v332
    %v334 = vpop.f32.mrf.mxu0
    %v335 = vadd.f32 %v154, %v334
    %336 = vmatmul.bf16.gmra.mxu0 %v229
    %v337 = vpop.f32.mrf.mxu0
    %v338 = vadd.f32 %v159, %v337
    %v339 = vpop.f32.mrf.mxu0
    %v340 = vadd.f32 %v164, %v339
    %341 = vdwg.mxu0
    %342 = vmatpush.bf16.msra.mxu0 0
    %343 = vmatpush.bf16.msra.mxu0 0
    %344 = vmatpush.bf16.msra.mxu0 0
    %345 = vmatpush.bf16.msra.mxu0 0
    %346 = vmatpush.bf16.msra.mxu0 0
    %347 = vmatpush.bf16.msra.mxu0 0
    %348 = vmatpush.bf16.msra.mxu0 0
    %349 = vmatpush.bf16.msra.mxu0 %v239
    %350 = vmatmul.bf16.gmra.mxu0 %v208
    %v351 = vpop.f32.mrf.mxu0
    %v352 = vadd.f32 %v89, %v351
    %v353 = vpop.f32.mrf.mxu0
    %v354 = vadd.f32 %v94, %v353
    %355 = vmatmul.bf16.gmra.mxu0 %v211
    %v356 = vpop.f32.mrf.mxu0
    %v357 = vadd.f32 %v99, %v356
    %v358 = vpop.f32.mrf.mxu0
    %v359 = vadd.f32 %v104, %v358
    %360 = vmatmul.bf16.gmra.mxu0 %v214
    %v361 = vpop.f32.mrf.mxu0
    %v362 = vadd.f32 %v109, %v361
    %v363 = vpop.f32.mrf.mxu0
    %v364 = vadd.f32 %v114, %v363
    %365 = vmatmul.bf16.gmra.mxu0 %v217
    %v366 = vpop.f32.mrf.mxu0
    %v367 = vadd.f32 %v119, %v366
    %v368 = vpop.f32.mrf.mxu0
    %v369 = vadd.f32 %v124, %v368
    %370 = vmatmul.bf16.gmra.mxu0 %v220
    %v371 = vpop.f32.mrf.mxu0
    %v372 = vadd.f32 %v129, %v371
    %v373 = vpop.f32.mrf.mxu0
    %v374 = vadd.f32 %v134, %v373
    %375 = vmatmul.bf16.gmra.mxu0 %v223
    %v376 = vpop.f32.mrf.mxu0
    %v377 = vadd.f32 %v139, %v376
    %v378 = vpop.f32.mrf.mxu0
    %v379 = vadd.f32 %v144, %v378
    %380 = vmatmul.bf16.gmra.mxu0 %v226
    %v381 = vpop.f32.mrf.mxu0
    %v382 = vadd.f32 %v149, %v381
    %v383 = vpop.f32.mrf.mxu0
    %v384 = vadd.f32 %v154, %v383
    %385 = vmatmul.bf16.gmra.mxu0 %v229
    %v386 = vpop.f32.mrf.mxu0
    %v387 = vadd.f32 %v159, %v386
    %v388 = vpop.f32.mrf.mxu0
    %v389 = vadd.f32 %v164, %v388
    %390 = vdwg.mxu0
    %391 = vmatpush.bf16.msra.mxu0 0
    %392 = vmatpush.bf16.msra.mxu0 0
    %393 = vmatpush.bf16.msra.mxu0 0
    %394 = vmatpush.bf16.msra.mxu0 0
    %395 = vmatpush.bf16.msra.mxu0 0
    %396 = vmatpush.bf16.msra.mxu0 0
    %397 = vmatpush.bf16.msra.mxu0 0
    %398 = vmatpush.bf16.msra.mxu0 %v242
    %399 = vmatmul.bf16.gmra.mxu0 %v208
    %v400 = vpop.f32.mrf.mxu0
    %v401 = vadd.f32 %v89, %v400
    %v402 = vpop.f32.mrf.mxu0
    %v403 = vadd.f32 %v94, %v402
    %404 = vmatmul.bf16.gmra.mxu0 %v211
    %v405 = vpop.f32.mrf.mxu0
    %v406 = vadd.f32 %v99, %v405
    %v407 = vpop.f32.mrf.mxu0
    %v408 = vadd.f32 %v104, %v407
    %409 = vmatmul.bf16.gmra.mxu0 %v214
    %v410 = vpop.f32.mrf.mxu0
    %v411 = vadd.f32 %v109, %v410
    %v412 = vpop.f32.mrf.mxu0
    %v413 = vadd.f32 %v114, %v412
    %414 = vmatmul.bf16.gmra.mxu0 %v217
    %v415 = vpop.f32.mrf.mxu0
    %v416 = vadd.f32 %v119, %v415
    %v417 = vpop.f32.mrf.mxu0
    %v418 = vadd.f32 %v124, %v417
    %419 = vmatmul.bf16.gmra.mxu0 %v220
    %v420 = vpop.f32.mrf.mxu0
    %v421 = vadd.f32 %v129, %v420
    %v422 = vpop.f32.mrf.mxu0
    %v423 = vadd.f32 %v134, %v422
    %424 = vmatmul.bf16.gmra.mxu0 %v223
    %v425 = vpop.f32.mrf.mxu0
    %v426 = vadd.f32 %v139, %v425
    %v427 = vpop.f32.mrf.mxu0
    %v428 = vadd.f32 %v144, %v427
    %429 = vmatmul.bf16.gmra.mxu0 %v226
    %v430 = vpop.f32.mrf.mxu0
    %v431 = vadd.f32 %v149, %v430
    %v432 = vpop.f32.mrf.mxu0
    %v433 = vadd.f32 %v154, %v432
    %434 = vmatmul.bf16.gmra.mxu0 %v229
    %v435 = vpop.f32.mrf.mxu0
    %v436 = vadd.f32 %v159, %v435
    %v437 = vpop.f32.mrf.mxu0
    %v438 = vadd.f32 %v164, %v437
    %439 = vdwg.mxu0
    %v440 = vmax.f32 %v254, 0.0
    %v441 = vmax.f32 %v303, 0.0
    %v442 = vmax.f32 %v352, 0.0
    %v443 = vmax.f32 %v401, 0.0
    %v444 = vmax.f32 %v256, 0.0
    %v445 = vmax.f32 %v305, 0.0
    %v446 = vmax.f32 %v354, 0.0
    %v447 = vmax.f32 %v403, 0.0
    %v448 = vmax.f32 %v259, 0.0
    %v449 = vmax.f32 %v308, 0.0
    %v450 = vmax.f32 %v357, 0.0
    %v451 = vmax.f32 %v406, 0.0
    %v452 = vmax.f32 %v261, 0.0
    %v453 = vmax.f32 %v310, 0.0
    %v454 = vmax.f32 %v359, 0.0
    %v455 = vmax.f32 %v408, 0.0
    %v456 = vmax.f32 %v264, 0.0
    %v457 = vmax.f32 %v313, 0.0
    %v458 = vmax.f32 %v362, 0.0
    %v459 = vmax.f32 %v411, 0.0
    %v460 = vmax.f32 %v266, 0.0
    %v461 = vmax.f32 %v315, 0.0
    %v462 = vmax.f32 %v364, 0.0
    %v463 = vmax.f32 %v413, 0.0
    %v464 = vmax.f32 %v269, 0.0
    %v465 = vmax.f32 %v318, 0.0
    %v466 = vmax.f32 %v367, 0.0
    %v467 = vmax.f32 %v416, 0.0
    %v468 = vmax.f32 %v271, 0.0
    %v469 = vmax.f32 %v320, 0.0
    %v470 = vmax.f32 %v369, 0.0
    %v471 = vmax.f32 %v418, 0.0
    %v472 = vmax.f32 %v274, 0.0
    %v473 = vmax.f32 %v323, 0.0
    %v474 = vmax.f32 %v372, 0.0
    %v475 = vmax.f32 %v421, 0.0
    %v476 = vmax.f32 %v276, 0.0
    %v477 = vmax.f32 %v325, 0.0
    %v478 = vmax.f32 %v374, 0.0
    %v479 = vmax.f32 %v423, 0.0
    %v480 = vmax.f32 %v279, 0.0
    %v481 = vmax.f32 %v328, 0.0
    %v482 = vmax.f32 %v377, 0.0
    %v483 = vmax.f32 %v426, 0.0
    %v484 = vmax.f32 %v281, 0.0
    %v485 = vmax.f32 %v330, 0.0
    %v486 = vmax.f32 %v379, 0.0
    %v487 = vmax.f32 %v428, 0.0
    %v488 = vmax.f32 %v284, 0.0
    %v489 = vmax.f32 %v333, 0.0
    %v490 = vmax.f32 %v382, 0.0
    %v491 = vmax.f32 %v431, 0.0
    %v492 = vmax.f32 %v286, 0.0
    %v493 = vmax.f32 %v335, 0.0
    %v494 = vmax.f32 %v384, 0.0
    %v495 = vmax.f32 %v433, 0.0
    %v496 = vmax.f32 %v289, 0.0
    %v497 = vmax.f32 %v338, 0.0
    %v498 = vmax.f32 %v387, 0.0
    %v499 = vmax.f32 %v436, 0.0
    %v500 = vmax.f32 %v291, 0.0
    %v501 = vmax.f32 %v340, 0.0
    %v502 = vmax.f32 %v389, 0.0
    %v503 = vmax.f32 %v438, 0.0
    %v504 = vld [vmem:[%s3] sm:$0xf]
    %v505 = vld [vmem:[%s3 + $0x4] sm:$0xf]
    %v506 = vld [vmem:[%s3 + $0x8] sm:$0xf]
    %v507 = vld [vmem:[%s3 + $0xc] sm:$0xf]
    %v508 = vld [vmem:[%s3 + $0x10] sm:$0xf]
    %v509 = vld [vmem:[%s3 + $0x14] sm:$0xf]
    %v510 = vld [vmem:[%s3 + $0x18] sm:$0xf]
    %v511 = vld [vmem:[%s3 + $0x1c] sm:$0xf]
    %v512 = vpack.c.bf16 %v444, %v440
    %v513 = vpack.c.bf16 %v445, %v441
    %v514 = vpack.c.bf16 %v446, %v442
    %v515 = vpack.c.bf16 %v447, %v443
    %v516 = vpack.c.bf16 %v452, %v448
    %v517 = vpack.c.bf16 %v453, %v449
    %v518 = vpack.c.bf16 %v454, %v450
    %v519 = vpack.c.bf16 %v455, %v451
    %v520 = vpack.c.bf16 %v460, %v456
    %v521 = vpack.c.bf16 %v461, %v457
    %v522 = vpack.c.bf16 %v462, %v458
    %v523 = vpack.c.bf16 %v463, %v459
    %v524 = vpack.c.bf16 %v468, %v464
    %v525 = vpack.c.bf16 %v469, %v465
    %v526 = vpack.c.bf16 %v470, %v466
    %v527 = vpack.c.bf16 %v471, %v467
    %v528 = vpack.c.bf16 %v476, %v472
    %v529 = vpack.c.bf16 %v477, %v473
    %v530 = vpack.c.bf16 %v478, %v474
    %v531 = vpack.c.bf16 %v479, %v475
    %v532 = vpack.c.bf16 %v484, %v480
    %v533 = vpack.c.bf16 %v485, %v481
    %v534 = vpack.c.bf16 %v486, %v482
    %v535 = vpack.c.bf16 %v487, %v483
    %v536 = vpack.c.bf16 %v492, %v488
    %v537 = vpack.c.bf16 %v493, %v489
    %v538 = vpack.c.bf16 %v494, %v490
    %v539 = vpack.c.bf16 %v495, %v491
    %v540 = vpack.c.bf16 %v500, %v496
    %v541 = vpack.c.bf16 %v501, %v497
    %v542 = vpack.c.bf16 %v502, %v498
    %v543 = vpack.c.bf16 %v503, %v499
    %v544 = vld [vmem:[%s4] sm:$0xff]
    %v545 = vld [vmem:[%s4 + $0x8] sm:$0xff]
    %v546 = vld [vmem:[%s4 + $0x10] sm:$0xff]
    %v547 = vld [vmem:[%s4 + $0x18] sm:$0xff]
    %v548 = vld [vmem:[%s4 + $0x20] sm:$0xff]
    %v549 = vld [vmem:[%s4 + $0x28] sm:$0xff]
    %v550 = vld [vmem:[%s4 + $0x30] sm:$0xff]
    %v551 = vld [vmem:[%s4 + $0x38] sm:$0xff]
    %553 = vset.pattern.permute.xlu0 0
    %554 = vperm.xlu0 %553, %v544
    %v555 = vpop.permute.xlu0 %554
    %558 = vset.pattern.permute.xlu0 0
    %559 = vperm.xlu0 %558, %v545
    %v560 = vpop.permute.xlu0 %559
    %563 = vset.pattern.permute.xlu0 0
    %564 = vperm.xlu0 %563, %v546
    %v565 = vpop.permute.xlu0 %564
    %568 = vset.pattern.permute.xlu0 0
    %569 = vperm.xlu0 %568, %v547
    %v570 = vpop.permute.xlu0 %569
    %573 = vset.pattern.permute.xlu0 0
    %574 = vperm.xlu0 %573, %v548
    %v575 = vpop.permute.xlu0 %574
    %578 = vset.pattern.permute.xlu0 0
    %579 = vperm.xlu0 %578, %v549
    %v580 = vpop.permute.xlu0 %579
    %583 = vset.pattern.permute.xlu0 0
    %584 = vperm.xlu0 %583, %v550
    %v585 = vpop.permute.xlu0 %584
    %588 = vset.pattern.permute.xlu0 0
    %589 = vperm.xlu0 %588, %v551
    %v590 = vpop.permute.xlu0 %589
    %v600 = vunpack.c.l.b16 %v504
    %v601 = vunpack.c.l.b16 %v505
    %v602 = vunpack.c.l.b16 %v506
    %v603 = vunpack.c.l.b16 %v507
    %v604 = vunpack.c.l.b16 %v508
    %v605 = vunpack.c.l.b16 %v509
    %v606 = vunpack.c.l.b16 %v510
    %v607 = vunpack.c.l.b16 %v511
    %v608 = vpack.c.b16 %v601, %v600
    %v609 = vpack.c.b16 %v603, %v602
    %v610 = vpack.c.b16 %v605, %v604
    %v611 = vpack.c.b16 %v607, %v606
    %616 = vmatpush.bf16.msra.mxu0 %v540
    %617 = vmatpush.bf16.msra.mxu0 %v536
    %618 = vmatpush.bf16.msra.mxu0 %v532
    %619 = vmatpush.bf16.msra.mxu0 %v528
    %620 = vmatpush.bf16.msra.mxu0 %v524
    %621 = vmatpush.bf16.msra.mxu0 %v520
    %622 = vmatpush.bf16.msra.mxu0 %v516
    %623 = vmatpush.bf16.msra.mxu0 %v512
    %624 = vmatmul.bf16.gmra.mxu0 %v608
    %v625 = vpop.f32.mrf.mxu0
    %v626 = vadd.f32 %v555, %v625
    %v627 = vpop.f32.mrf.mxu0
    %v628 = vadd.f32 %v560, %v627
    %629 = vmatmul.bf16.gmra.mxu0 %v609
    %v630 = vpop.f32.mrf.mxu0
    %v631 = vadd.f32 %v565, %v630
    %v632 = vpop.f32.mrf.mxu0
    %v633 = vadd.f32 %v570, %v632
    %634 = vmatmul.bf16.gmra.mxu0 %v610
    %v635 = vpop.f32.mrf.mxu0
    %v636 = vadd.f32 %v575, %v635
    %v637 = vpop.f32.mrf.mxu0
    %v638 = vadd.f32 %v580, %v637
    %639 = vmatmul.bf16.gmra.mxu0 %v611
    %v640 = vpop.f32.mrf.mxu0
    %v641 = vadd.f32 %v585, %v640
    %v642 = vpop.f32.mrf.mxu0
    %v643 = vadd.f32 %v590, %v642
    %644 = vdwg.mxu0
    %645 = vmatpush.bf16.msra.mxu0 %v541
    %646 = vmatpush.bf16.msra.mxu0 %v537
    %647 = vmatpush.bf16.msra.mxu0 %v533
    %648 = vmatpush.bf16.msra.mxu0 %v529
    %649 = vmatpush.bf16.msra.mxu0 %v525
    %650 = vmatpush.bf16.msra.mxu0 %v521
    %651 = vmatpush.bf16.msra.mxu0 %v517
    %652 = vmatpush.bf16.msra.mxu0 %v513
    %653 = vmatmul.bf16.gmra.mxu0 %v608
    %v654 = vpop.f32.mrf.mxu0
    %v655 = vadd.f32 %v555, %v654
    %v656 = vpop.f32.mrf.mxu0
    %v657 = vadd.f32 %v560, %v656
    %658 = vmatmul.bf16.gmra.mxu0 %v609
    %v659 = vpop.f32.mrf.mxu0
    %v660 = vadd.f32 %v565, %v659
    %v661 = vpop.f32.mrf.mxu0
    %v662 = vadd.f32 %v570, %v661
    %663 = vmatmul.bf16.gmra.mxu0 %v610
    %v664 = vpop.f32.mrf.mxu0
    %v665 = vadd.f32 %v575, %v664
    %v666 = vpop.f32.mrf.mxu0
    %v667 = vadd.f32 %v580, %v666
    %668 = vmatmul.bf16.gmra.mxu0 %v611
    %v669 = vpop.f32.mrf.mxu0
    %v670 = vadd.f32 %v585, %v669
    %v671 = vpop.f32.mrf.mxu0
    %v672 = vadd.f32 %v590, %v671
    %673 = vdwg.mxu0
    %674 = vmatpush.bf16.msra.mxu0 %v542
    %675 = vmatpush.bf16.msra.mxu0 %v538
    %676 = vmatpush.bf16.msra.mxu0 %v534
    %677 = vmatpush.bf16.msra.mxu0 %v530
    %678 = vmatpush.bf16.msra.mxu0 %v526
    %679 = vmatpush.bf16.msra.mxu0 %v522
    %680 = vmatpush.bf16.msra.mxu0 %v518
    %681 = vmatpush.bf16.msra.mxu0 %v514
    %682 = vmatmul.bf16.gmra.mxu0 %v608
    %v683 = vpop.f32.mrf.mxu0
    %v684 = vadd.f32 %v555, %v683
    %v685 = vpop.f32.mrf.mxu0
    %v686 = vadd.f32 %v560, %v685
    %687 = vmatmul.bf16.gmra.mxu0 %v609
    %v688 = vpop.f32.mrf.mxu0
    %v689 = vadd.f32 %v565, %v688
    %v690 = vpop.f32.mrf.mxu0
    %v691 = vadd.f32 %v570, %v690
    %692 = vmatmul.bf16.gmra.mxu0 %v610
    %v693 = vpop.f32.mrf.mxu0
    %v694 = vadd.f32 %v575, %v693
    %v695 = vpop.f32.mrf.mxu0
    %v696 = vadd.f32 %v580, %v695
    %697 = vmatmul.bf16.gmra.mxu0 %v611
    %v698 = vpop.f32.mrf.mxu0
    %v699 = vadd.f32 %v585, %v698
    %v700 = vpop.f32.mrf.mxu0
    %v701 = vadd.f32 %v590, %v700
    %702 = vdwg.mxu0
    %703 = vmatpush.bf16.msra.mxu0 %v543
    %704 = vmatpush.bf16.msra.mxu0 %v539
    %705 = vmatpush.bf16.msra.mxu0 %v535
    %706 = vmatpush.bf16.msra.mxu0 %v531
    %707 = vmatpush.bf16.msra.mxu0 %v527
    %708 = vmatpush.bf16.msra.mxu0 %v523
    %709 = vmatpush.bf16.msra.mxu0 %v519
    %710 = vmatpush.bf16.msra.mxu0 %v515
    %711 = vmatmul.bf16.gmra.mxu0 %v608
    %v712 = vpop.f32.mrf.mxu0
    %v713 = vadd.f32 %v555, %v712
    %v714 = vpop.f32.mrf.mxu0
    %v715 = vadd.f32 %v560, %v714
    %716 = vmatmul.bf16.gmra.mxu0 %v609
    %v717 = vpop.f32.mrf.mxu0
    %v718 = vadd.f32 %v565, %v717
    %v719 = vpop.f32.mrf.mxu0
    %v720 = vadd.f32 %v570, %v719
    %721 = vmatmul.bf16.gmra.mxu0 %v610
    %v722 = vpop.f32.mrf.mxu0
    %v723 = vadd.f32 %v575, %v722
    %v724 = vpop.f32.mrf.mxu0
    %v725 = vadd.f32 %v580, %v724
    %726 = vmatmul.bf16.gmra.mxu0 %v611
    %v727 = vpop.f32.mrf.mxu0
    %v728 = vadd.f32 %v585, %v727
    %v729 = vpop.f32.mrf.mxu0
    %v730 = vadd.f32 %v590, %v729
    %731 = vdwg.mxu0
    %v732 = vmax.f32 %v626, 0.0
    %v733 = vmax.f32 %v655, 0.0
    %v734 = vmax.f32 %v684, 0.0
    %v735 = vmax.f32 %v713, 0.0
    %v736 = vmax.f32 %v628, 0.0
    %v737 = vmax.f32 %v657, 0.0
    %v738 = vmax.f32 %v686, 0.0
    %v739 = vmax.f32 %v715, 0.0
    %v740 = vmax.f32 %v631, 0.0
    %v741 = vmax.f32 %v660, 0.0
    %v742 = vmax.f32 %v689, 0.0
    %v743 = vmax.f32 %v718, 0.0
    %v744 = vmax.f32 %v633, 0.0
    %v745 = vmax.f32 %v662, 0.0
    %v746 = vmax.f32 %v691, 0.0
    %v747 = vmax.f32 %v720, 0.0
    %v748 = vmax.f32 %v636, 0.0
    %v749 = vmax.f32 %v665, 0.0
    %v750 = vmax.f32 %v694, 0.0
    %v751 = vmax.f32 %v723, 0.0
    %v752 = vmax.f32 %v638, 0.0
    %v753 = vmax.f32 %v667, 0.0
    %v754 = vmax.f32 %v696, 0.0
    %v755 = vmax.f32 %v725, 0.0
    %v756 = vmax.f32 %v641, 0.0
    %v757 = vmax.f32 %v670, 0.0
    %v758 = vmax.f32 %v699, 0.0
    %v759 = vmax.f32 %v728, 0.0
    %v760 = vmax.f32 %v643, 0.0
    %v761 = vmax.f32 %v672, 0.0
    %v762 = vmax.f32 %v701, 0.0
    %v763 = vmax.f32 %v730, 0.0
    %v764 = vld [vmem:[%s5] sm:$0xf]
    %v765 = vld [vmem:[%s5 + $0x4] sm:$0xf]
    %v766 = vld [vmem:[%s5 + $0x8] sm:$0xf]
    %v767 = vld [vmem:[%s5 + $0xc] sm:$0xf]
    %v768 = vpack.c.bf16 %v736, %v732
    %v769 = vpack.c.bf16 %v737, %v733
    %v770 = vpack.c.bf16 %v738, %v734
    %v771 = vpack.c.bf16 %v739, %v735
    %v772 = vpack.c.bf16 %v744, %v740
    %v773 = vpack.c.bf16 %v745, %v741
    %v774 = vpack.c.bf16 %v746, %v742
    %v775 = vpack.c.bf16 %v747, %v743
    %v776 = vpack.c.bf16 %v752, %v748
    %v777 = vpack.c.bf16 %v753, %v749
    %v778 = vpack.c.bf16 %v754, %v750
    %v779 = vpack.c.bf16 %v755, %v751
    %v780 = vpack.c.bf16 %v760, %v756
    %v781 = vpack.c.bf16 %v761, %v757
    %v782 = vpack.c.bf16 %v762, %v758
    %v783 = vpack.c.bf16 %v763, %v759
    %v784 = vld [vmem:[%s6] sm:$0xff]
    %v785 = vld [vmem:[%s6 + $0x8] sm:$0xff]
    %v786 = vld [vmem:[%s6 + $0x10] sm:$0xff]
    %v787 = vld [vmem:[%s6 + $0x18] sm:$0xff]
    %789 = vset.pattern.permute.xlu0 0
    %790 = vperm.xlu0 %789, %v784
    %v791 = vpop.permute.xlu0 %790
    %794 = vset.pattern.permute.xlu0 0
    %795 = vperm.xlu0 %794, %v785
    %v796 = vpop.permute.xlu0 %795
    %799 = vset.pattern.permute.xlu0 0
    %800 = vperm.xlu0 %799, %v786
    %v801 = vpop.permute.xlu0 %800
    %804 = vset.pattern.permute.xlu0 0
    %805 = vperm.xlu0 %804, %v787
    %v806 = vpop.permute.xlu0 %805
    %v812 = vunpack.c.l.b16 %v764
    %v813 = vunpack.c.l.b16 %v765
    %v814 = vunpack.c.l.b16 %v766
    %v815 = vunpack.c.l.b16 %v767
    %v816 = vpack.c.b16 %v813, %v812
    %v817 = vpack.c.b16 %v815, %v814
    %vm818 = vcmask 523264
    %v820 = vsel %vm818, %v816, 0
    %v823 = vsel %vm818, %v817, 0
    %825 = vmatpush.bf16.msra.mxu0 0
    %826 = vmatpush.bf16.msra.mxu0 0
    %827 = vmatpush.bf16.msra.mxu0 0
    %828 = vmatpush.bf16.msra.mxu0 0
    %829 = vmatpush.bf16.msra.mxu0 %v780
    %830 = vmatpush.bf16.msra.mxu0 %v776
    %831 = vmatpush.bf16.msra.mxu0 %v772
    %832 = vmatpush.bf16.msra.mxu0 %v768
    %833 = vmatmul.bf16.gmra.mxu0 %v820
    %v834 = vpop.f32.mrf.mxu0
    %v835 = vadd.f32 %v791, %v834
    %v836 = vpop.f32.mrf.mxu0
    %v837 = vadd.f32 %v796, %v836
    %838 = vmatmul.bf16.gmra.mxu0 %v823
    %v839 = vpop.f32.mrf.mxu0
    %v840 = vadd.f32 %v801, %v839
    %v841 = vpop.f32.mrf.mxu0
    %v842 = vadd.f32 %v806, %v841
    %843 = vdwg.mxu0
    %844 = vmatpush.bf16.msra.mxu0 0
    %845 = vmatpush.bf16.msra.mxu0 0
    %846 = vmatpush.bf16.msra.mxu0 0
    %847 = vmatpush.bf16.msra.mxu0 0
    %848 = vmatpush.bf16.msra.mxu0 %v781
    %849 = vmatpush.bf16.msra.mxu0 %v777
    %850 = vmatpush.bf16.msra.mxu0 %v773
    %851 = vmatpush.bf16.msra.mxu0 %v769
    %852 = vmatmul.bf16.gmra.mxu0 %v820
    %v853 = vpop.f32.mrf.mxu0
    %v854 = vadd.f32 %v791, %v853
    %v855 = vpop.f32.mrf.mxu0
    %v856 = vadd.f32 %v796, %v855
    %857 = vmatmul.bf16.gmra.mxu0 %v823
    %v858 = vpop.f32.mrf.mxu0
    %v859 = vadd.f32 %v801, %v858
    %v860 = vpop.f32.mrf.mxu0
    %v861 = vadd.f32 %v806, %v860
    %862 = vdwg.mxu0
    %863 = vmatpush.bf16.msra.mxu0 0
    %864 = vmatpush.bf16.msra.mxu0 0
    %865 = vmatpush.bf16.msra.mxu0 0
    %866 = vmatpush.bf16.msra.mxu0 0
    %867 = vmatpush.bf16.msra.mxu0 %v782
    %868 = vmatpush.bf16.msra.mxu0 %v778
    %869 = vmatpush.bf16.msra.mxu0 %v774
    %870 = vmatpush.bf16.msra.mxu0 %v770
    %871 = vmatmul.bf16.gmra.mxu0 %v820
    %v872 = vpop.f32.mrf.mxu0
    %v873 = vadd.f32 %v791, %v872
    %v874 = vpop.f32.mrf.mxu0
    %v875 = vadd.f32 %v796, %v874
    %876 = vmatmul.bf16.gmra.mxu0 %v823
    %v877 = vpop.f32.mrf.mxu0
    %v878 = vadd.f32 %v801, %v877
    %v879 = vpop.f32.mrf.mxu0
    %v880 = vadd.f32 %v806, %v879
    %881 = vdwg.mxu0
    %882 = vmatpush.bf16.msra.mxu0 0
    %883 = vmatpush.bf16.msra.mxu0 0
    %884 = vmatpush.bf16.msra.mxu0 0
    %885 = vmatpush.bf16.msra.mxu0 0
    %886 = vmatpush.bf16.msra.mxu0 %v783
    %887 = vmatpush.bf16.msra.mxu0 %v779
    %888 = vmatpush.bf16.msra.mxu0 %v775
    %889 = vmatpush.bf16.msra.mxu0 %v771
    %890 = vmatmul.bf16.gmra.mxu0 %v820
    %v891 = vpop.f32.mrf.mxu0
    %v892 = vadd.f32 %v791, %v891
    %v893 = vpop.f32.mrf.mxu0
    %v894 = vadd.f32 %v796, %v893
    %895 = vmatmul.bf16.gmra.mxu0 %v823
    %v896 = vpop.f32.mrf.mxu0
    %v897 = vadd.f32 %v801, %v896
    %v898 = vpop.f32.mrf.mxu0
    %v899 = vadd.f32 %v806, %v898
    %900 = vdwg.mxu0
    %v901 = vmax.f32 %v835, 0.0
    %v902 = vmax.f32 %v854, 0.0
    %v903 = vmax.f32 %v873, 0.0
    %v904 = vmax.f32 %v892, 0.0
    %v905 = vmax.f32 %v837, 0.0
    %v906 = vmax.f32 %v856, 0.0
    %v907 = vmax.f32 %v875, 0.0
    %v908 = vmax.f32 %v894, 0.0
    %v909 = vmax.f32 %v840, 0.0
    %v910 = vmax.f32 %v859, 0.0
    %v911 = vmax.f32 %v878, 0.0
    %v912 = vmax.f32 %v897, 0.0
    %v913 = vmax.f32 %v842, 0.0
    %v914 = vmax.f32 %v861, 0.0
    %v915 = vmax.f32 %v880, 0.0
    %v916 = vmax.f32 %v899, 0.0
    %v917 = vld [vmem:[%s7] sm:$0xff]
    %v918 = vld [vmem:[%s7 + $0x8] sm:$0xff]
    %v919 = vld [vmem:[%s7 + $0x10] sm:$0xff]
    %v920 = vld [vmem:[%s7 + $0x18] sm:$0xff]
    %922 = vset.pattern.permute.xlu0 0
    %923 = vperm.xlu0 %922, %v917
    %v924 = vpop.permute.xlu0 %923
    %927 = vset.pattern.permute.xlu0 0
    %928 = vperm.xlu0 %927, %v918
    %v929 = vpop.permute.xlu0 %928
    %932 = vset.pattern.permute.xlu0 0
    %933 = vperm.xlu0 %932, %v919
    %v934 = vpop.permute.xlu0 %933
    %937 = vset.pattern.permute.xlu0 0
    %938 = vperm.xlu0 %937, %v920
    %v939 = vpop.permute.xlu0 %938
    %v941 = vmul.f32 %v901, %v924
    %v942 = vmul.f32 %v902, %v924
    %v943 = vmul.f32 %v903, %v924
    %v944 = vmul.f32 %v904, %v924
    %v945 = vmul.f32 %v905, %v929
    %v946 = vmul.f32 %v906, %v929
    %v947 = vmul.f32 %v907, %v929
    %v948 = vmul.f32 %v908, %v929
    %v949 = vmul.f32 %v909, %v934
    %v950 = vmul.f32 %v910, %v934
    %v951 = vmul.f32 %v911, %v934
    %v952 = vmul.f32 %v912, %v934
    %v953 = vmul.f32 %v913, %v939
    %v954 = vmul.f32 %v914, %v939
    %v955 = vmul.f32 %v915, %v939
    %v956 = vmul.f32 %v916, %v939
    %v957 = vadd.f32 %v941, %v945
    %v958 = vadd.f32 %v957, %v949
    %v959 = vadd.f32 %v958, %v953
    %v960 = vrot.slane %v959, 4
    %v961 = vadd.f32 %v959, %v960
    %v962 = vrot.slane %v961, 2
    %v963 = vadd.f32 %v961, %v962
    %v964 = vrot.slane %v963, 1
    %v965 = vadd.f32 %v963, %v964
    %v966 = vadd.f32 %v942, %v946
    %v967 = vadd.f32 %v966, %v950
    %v968 = vadd.f32 %v967, %v954
    %v969 = vrot.slane %v968, 4
    %v970 = vadd.f32 %v968, %v969
    %v971 = vrot.slane %v970, 2
    %v972 = vadd.f32 %v970, %v971
    %v973 = vrot.slane %v972, 1
    %v974 = vadd.f32 %v972, %v973
    %v975 = vadd.f32 %v943, %v947
    %v976 = vadd.f32 %v975, %v951
    %v977 = vadd.f32 %v976, %v955
    %v978 = vrot.slane %v977, 4
    %v979 = vadd.f32 %v977, %v978
    %v980 = vrot.slane %v979, 2
    %v981 = vadd.f32 %v979, %v980
    %v982 = vrot.slane %v981, 1
    %v983 = vadd.f32 %v981, %v982
    %v984 = vadd.f32 %v944, %v948
    %v985 = vadd.f32 %v984, %v952
    %v986 = vadd.f32 %v985, %v956
    %v987 = vrot.slane %v986, 4
    %v988 = vadd.f32 %v986, %v987
    %v989 = vrot.slane %v988, 2
    %v990 = vadd.f32 %v988, %v989
    %v991 = vrot.slane %v990, 1
    %v992 = vadd.f32 %v990, %v991
    %v993 = vld [vmem:[#allocation2] sm:$0x1]
    %995 = vset.pattern.permute.xlu0 0
    %996 = vperm.xlu0 %995, %v993
    %v997 = vpop.permute.xlu0 %996
    %v999 = vperm.slane %v997, 0
    %v1000 = vadd.f32 %v965, %v999
    %v1001 = vadd.f32 %v974, %v999
    %v1002 = vadd.f32 %v983, %v999
    %v1003 = vadd.f32 %v992, %v999
    %v1004 = vmax.f32 %v1000, 0.0
    %v1005 = vmax.f32 %v1001, 0.0
    %v1006 = vmax.f32 %v1002, 0.0
    %v1007 = vmax.f32 %v1003, 0.0
    %v1008 = vld [vmem:[#allocation3] sm:$0x1]
    %1010 = vset.pattern.permute.xlu0 0
    %1011 = vperm.xlu0 %1010, %v1008
    %v1012 = vpop.permute.xlu0 %1011
    %v1014 = vperm.slane %v1012, 0
    %v1015 = vmul.f32 %v1004, %v1014
    %v1016 = vmul.f32 %v1005, %v1014
    %v1017 = vmul.f32 %v1006, %v1014
    %v1018 = vmul.f32 %v1007, %v1014
    %v1019 = vld [vmem:[#allocation4] sm:$0x1]
    %1021 = vset.pattern.permute.xlu0 0
    %1022 = vperm.xlu0 %1021, %v1019
    %v1023 = vpop.permute.xlu0 %1022
    %v1025 = vperm.slane %v1023, 0
    %v1026 = vadd.f32 %v1015, %v1025
    %v1027 = vadd.f32 %v1016, %v1025
    %v1028 = vadd.f32 %v1017, %v1025
    %v1029 = vadd.f32 %v1018, %v1025
    %vm1030 = vcmp.gt.f32.partialorder %v1026, 0.0
    %vm1031 = vcmp.gt.f32.partialorder %v1027, 0.0
    %vm1032 = vcmp.gt.f32.partialorder %v1028, 0.0
    %vm1033 = vcmp.gt.f32.partialorder %v1029, 0.0
    %v1034 = vsel %vm1030, 1, 0
    %v1035 = vsel %vm1031, 1, 0
    %v1036 = vsel %vm1032, 1, 0
    %v1037 = vsel %vm1033, 1, 0
    %v1038 = vcvt.s32.f32 %v1034
    %v1039 = vcvt.s32.f32 %v1035
    %v1040 = vcvt.s32.f32 %v1036
    %v1041 = vcvt.s32.f32 %v1037
    %v1046 = vrot.slane %v1039, 7
    %v1047 = vrot.slane %v1040, 6
    %v1048 = vrot.slane %v1041, 5
    %vm1049 = vcmask 1040384
    %v1050 = vsel %vm1049, %v1038, %v1046
    %vm1051 = vcmask 1042434
    %v1052 = vsel %vm1051, %v1047, %v1048
    %vm1053 = vcmask 1041408
    %v1054 = vsel %vm1053, %v1050, %v1052
    %v1056 = vlaneseq
    %vm1057 = vcmp.ge.s32.totalorder %v1056, 0
    %vm1058 = vcmp.lt.s32.totalorder %v1056, 512
    %vm1059 = vmand %vm1057, %vm1058
    %1060 = vst.msk [vmem:[#allocation5] sm:$0xf] %vm1059, %v1054
    // Predicated region
    $region46: #{tpu_custom_call.1} parent=1 // pred_check
      _
    $region47: #{tpu_custom_call.1} parent=1 // pred_check_branch
      %1062 = sbr.rel (0) target = $region49
    $region48: #{tpu_custom_call.1} parent=1 // pred_region
      %1064 = vsyncadd [#allocation6], 0
      %s1066 = sshll.u32 [#allocation5], 4
      %s1067 = int_to_ptr.vmem [resolvable:$true] %s1066
      %s1068 = sshll.u32 %s11, 4
      %s1069 = int_to_ptr.hbm [resolvable:$true] %s1068
      %1071 = dma.vmem_to_hbm [thread:$0]  %s1067, 64, %s1069, [#allocation6]
    $region49: #{tpu_custom_call.1} parent=1 // pred_fallthru
      _
    // Predicated region
    $region50: #{tpu_custom_call.1} parent=1 // pred_check
      _
    $region51: #{tpu_custom_call.1} parent=1 // pred_check_branch
      %1073 = sbr.rel (0) target = $region53
    $region52: #{tpu_custom_call.1} parent=1 // pred_region
      %1075 = dma.done [#allocation6], 64
    $region53: #{tpu_custom_call.1} parent=1 // pred_fallthru
      _
    %1076 = vsyncpa [#allocation6], 1

</llo_original>
